<compile_context>
chip_gen: v5e
topology: v5e:2x2
jax: 0.10.0
libtpu: 0.0.40
codegen_flags: <defaults>
</compile_context>

<pallas_src>
import functools

import jax
import jax.numpy as jnp
from jax.experimental import pallas as pl
from jax.experimental.pallas import tpu as pltpu

_LANE = 128
_SUBLANE = 8
_MIN_PALLAS_ELEMENTS = 1 << 20      # below this a fused XLA reduction wins
_VMEM_LIMIT_BYTES = 48 << 20        # < 64 MiB v7x physical; plenty on v5e/v6e
_BLOCK_BYTES_DEFAULT = 4 << 20      # per-input block -> 16 MiB double-buffered
_BLOCK_BYTES_V7X = 8 << 20          # v7x: bigger blocks at ~3.2 TB/s HBM


def _round_down(x, m):
    return (x // m) * m


def _chip_config(itemsize):
    """Return (max block rows, #core-splits) for the current chip + dtype."""
    kind = ""
    try:
        kind = jax.devices()[0].device_kind.lower()
    except Exception:  # be robust off-TPU / in interpret mode
        pass
    if "v7" in kind:                      # 2 TensorCores / chip
        block_bytes, splits = _BLOCK_BYTES_V7X, 2
    else:                                 # v5e / v6e: 1 TensorCore / chip
        block_bytes, splits = _BLOCK_BYTES_DEFAULT, 1
    # Constant bytes/step across dtypes; multiple of 32 rows so bf16 (16,128)
    # and int8 (32,128) minimum tiles are respected for tiled (partial) blocks.
    rows = _round_down(block_bytes // (_LANE * itemsize), 32)
    return max(32, rows), splits


def _esr_kernel(out_ref, tgt_ref, num_ref, den_ref, *,
                rows_kernel, block_rows, k_steps, need_mask):
    c = pl.program_id(0)    # core-split axis ("parallel")
    k = pl.program_id(1)    # reduction axis ("arbitrary")

    @pl.when(k == 0)
    def _():
        num_ref[...] = jnp.zeros_like(num_ref)
        den_ref[...] = jnp.zeros_like(den_ref)

    g = block_rows // _SUBLANE

    def accumulate(o, t):
        diff = t - o
        # (block_rows,128) -> (g,8,128) grouping is layout-preserving; the
        # axis-0 sum is g-1 VPU vreg adds per accumulator (no cross-lane work).
        num_ref[...] += jnp.sum((diff * diff).reshape(g, _SUBLANE, _LANE), axis=0)
        den_ref[...] += jnp.sum((t * t).reshape(g, _SUBLANE, _LANE), axis=0)

    if not need_mask:
        accumulate(out_ref[...].astype(jnp.float32),
                   tgt_ref[...].astype(jnp.float32))
    else:
        blk = c * k_steps + k          # logical (pre-clamp) block index
        row0 = blk * block_rows
        is_edge = row0 + block_rows > rows_kernel

        @pl.when(jnp.logical_not(is_edge))
        def _():
            # Interior blocks: unmasked fast path.
            accumulate(out_ref[...].astype(jnp.float32),
                       tgt_ref[...].astype(jnp.float32))

        @pl.when(is_edge)
        def _():
            # Only ragged / duplicated-clamped edge blocks pay for the mask.
            row_ids = row0 + jax.lax.broadcasted_iota(
                jnp.int32, (block_rows, 1), 0)
            valid = row_ids < rows_kernel
            o = jnp.where(valid, out_ref[...].astype(jnp.float32), 0.0)
            t = jnp.where(valid, tgt_ref[...].astype(jnp.float32), 0.0)
            accumulate(o, t)


def _esr_ref(o, t, epsilon):
    o = o.astype(jnp.float32)
    t = t.astype(jnp.float32)
    return jnp.mean((t - o) ** 2) / (jnp.mean(t * t) + jnp.float32(epsilon))


def esr_loss(output, target, epsilon=1e-5, *,
             force_pallas=False, block_rows_max=None):
    """ESR loss: mean((target-output)^2) / (mean(target^2) + epsilon)."""
    assert output.shape == target.shape
    n = int(output.size)
    itemsize = jnp.dtype(output.dtype).itemsize
    rows_total = n // _LANE

    # Small-n fallback: pallas_call launch + single-step pipeline overhead
    # dominates tiny inputs; a fused XLA reduction is faster.
    if rows_total < _SUBLANE or ((not force_pallas) and n < _MIN_PALLAS_ELEMENTS):
        return _esr_ref(output.reshape(-1), target.reshape(-1), epsilon)

    brm, num_splits_max = _chip_config(itemsize)
    if block_rows_max is not None:          # testing / tuning override
        brm = max(32, _round_down(int(block_rows_max), 32))

    out_flat = output.reshape(-1)
    tgt_flat = target.reshape(-1)

    # Rows handled by the kernel; the (<1 vreg-row of) leftover elements are
    # reduced in plain JAX so there is NO full-array jnp.pad copy.
    if rows_total <= brm:
        rows_kernel = _round_down(rows_total, _SUBLANE)  # one full-array block
        block_rows = rows_kernel
    else:
        rows_kernel = rows_total
        block_rows = brm
    m = rows_kernel * _LANE

    if m == n:
        out2d = out_flat.reshape(rows_kernel, _LANE)
        tgt2d = tgt_flat.reshape(rows_kernel, _LANE)
        tail_num = jnp.float32(0.0)
        tail_den = jnp.float32(0.0)
    else:
        out2d = out_flat[:m].reshape(rows_kernel, _LANE)
        tgt2d = tgt_flat[:m].reshape(rows_kernel, _LANE)
        to = out_flat[m:].astype(jnp.float32)
        tt = tgt_flat[m:].astype(jnp.float32)
        tail_num = jnp.sum((tt - to) ** 2)
        tail_den = jnp.sum(tt * tt)

    n_blocks = pl.cdiv(rows_kernel, block_rows)
    num_splits = num_splits_max if n_blocks >= num_splits_max else 1
    k_steps = pl.cdiv(n_blocks, num_splits)
    need_mask = (num_splits * k_steps * block_rows) != rows_kernel

    def in_index_map(c, k):
        # Clamp so the DMA never targets a fully out-of-range block; the
        # in-kernel row mask zeroes any duplicated / ragged contribution.
        return (jnp.minimum(c * k_steps + k, n_blocks - 1), 0)

    kernel = functools.partial(
        _esr_kernel, rows_kernel=rows_kernel, block_rows=block_rows,
        k_steps=k_steps, need_mask=need_mask)

    acc_rows = num_splits * _SUBLANE
    cost = pl.CostEstimate(
        flops=5 * m,
        transcendentals=0,
        bytes_accessed=2 * m * itemsize + 2 * acc_rows * _LANE * 4)

    num_out, den_out = pl.pallas_call(
        kernel,
        out_shape=(
            jax.ShapeDtypeStruct((acc_rows, _LANE), jnp.float32),
            jax.ShapeDtypeStruct((acc_rows, _LANE), jnp.float32),
        ),
        grid_spec=pltpu.PrefetchScalarGridSpec(
            num_scalar_prefetch=0,
            grid=(num_splits, k_steps),
            in_specs=[
                pl.BlockSpec((block_rows, _LANE), in_index_map),
                pl.BlockSpec((block_rows, _LANE), in_index_map),
            ],
            out_specs=(
                pl.BlockSpec((_SUBLANE, _LANE), lambda c, k: (c, 0)),
                pl.BlockSpec((_SUBLANE, _LANE), lambda c, k: (c, 0)),
            ),
        ),
        compiler_params=pltpu.CompilerParams(
            dimension_semantics=("parallel", "arbitrary"),
            vmem_limit_bytes=_VMEM_LIMIT_BYTES),
        cost_estimate=cost,
    )(out2d, tgt2d)

    # Final (tiny) cross-lane/sublane reduction + ESR combine in plain JAX.
    inv_n = jnp.float32(1.0 / n)
    num = (jnp.sum(num_out) + tail_num) * inv_n                       # mean((t-o)^2)
    den = (jnp.sum(den_out) + tail_den) * inv_n + jnp.float32(epsilon)  # mean(t^2)+eps
    return num / den
    # TODO(synk): this matches the given PyTorch module exactly (global means);
    # auraloss-style per-item ESR (ratio per batch element, then mean) differs.


if __name__ == "__main__":
    key = jax.random.PRNGKey(0)
    keys = jax.random.split(key, 6)

    # 1) Module-shaped inputs (2,4,16,16): single full-array block path.
    out1 = jax.random.normal(keys[0], (2, 4, 16, 16), dtype=jnp.float32)
    tgt1 = jax.random.normal(keys[1], (2, 4, 16, 16), dtype=jnp.float32)
    loss1 = esr_loss(out1, tgt1, force_pallas=True)
    jax.block_until_ready(loss1)
    ref1 = jnp.mean((tgt1 - out1) ** 2) / (jnp.mean(tgt1 ** 2) + 1e-5)
    assert jnp.allclose(loss1, ref1, rtol=5e-5, atol=1e-6), (loss1, ref1)

    # 2) Ragged size (1029 elements, not a multiple of 128): JAX-tail path,
    #    no jnp.pad copies.
    out2 = jax.random.normal(keys[2], (3, 343), dtype=jnp.float32)
    tgt2 = jax.random.normal(keys[3], (3, 343), dtype=jnp.float32)
    loss2 = esr_loss(out2, tgt2, force_pallas=True)
    jax.block_until_ready(loss2)
    ref2 = jnp.mean((tgt2 - out2) ** 2) / (jnp.mean(tgt2 ** 2) + 1e-5)
    assert jnp.allclose(loss2, ref2, rtol=5e-5, atol=1e-6), (loss2, ref2)

    # 3) Multi-block + masked-edge path (small block override for testing).
    out3 = jax.random.normal(keys[4], (5, 2048), dtype=jnp.float32)
    tgt3 = jax.random.normal(keys[5], (5, 2048), dtype=jnp.float32)
    loss3 = esr_loss(out3, tgt3, force_pallas=True, block_rows_max=32)
    jax.block_until_ready(loss3)
    ref3 = jnp.mean((tgt3 - out3) ** 2) / (jnp.mean(tgt3 ** 2) + 1e-5)
    assert jnp.allclose(loss3, ref3, rtol=5e-5, atol=1e-6), (loss3, ref3)

    print("KERNEL_OK")
</pallas_src>

<mosaic_0001>
module attributes {stable_mosaic.version = 11 : i64} {
  func.func @_esr_kernel(%arg0: i32, %arg1: i32, %arg2: memref<16x128xf32, #tpu.memory_space<vmem>>, %arg3: memref<16x128xf32, #tpu.memory_space<vmem>>, %arg4: memref<8x128xf32, #tpu.memory_space<vmem>>, %arg5: memref<8x128xf32, #tpu.memory_space<vmem>>) attributes {dimension_semantics = [#tpu.dimension_semantics<parallel>, #tpu.dimension_semantics<arbitrary>], iteration_bounds = array<i64: 1, 1>, scalar_prefetch = 0 : i64, scratch_operands = 0 : i64, tpu.core_type = #tpu.core_type<tc>, window_params = [{transform_indices = @transform_0, window_bounds = array<i64: 16, 128>}, {transform_indices = @transform_1, window_bounds = array<i64: 16, 128>}, {transform_indices = @transform_2, window_bounds = array<i64: 8, 128>}, {transform_indices = @transform_3, window_bounds = array<i64: 8, 128>}]} {
    %c0_i32 = arith.constant 0 : i32
    %0 = arith.cmpi eq, %arg1, %c0_i32 : i32
    %1 = arith.extui %0 : i1 to i32
    %c0_i32_0 = arith.constant 0 : i32
    %2 = arith.cmpi ne, %1, %c0_i32_0 : i32
    scf.if %2 {
      %cst_13 = arith.constant 0.000000e+00 : f32
      %18 = vector.broadcast %cst_13 : f32 to vector<8x128xf32>
      %c0_14 = arith.constant 0 : index
      %c0_15 = arith.constant 0 : index
      %19 = vector.load %arg4[%c0_14, %c0_15] : memref<8x128xf32, #tpu.memory_space<vmem>>, vector<8x128xf32>
      tpu.vector_store %arg4[%c0_14, %c0_15], %18 {strides = array<i32>} : memref<8x128xf32, #tpu.memory_space<vmem>>, vector<8x128xf32>,
      %cst_16 = arith.constant 0.000000e+00 : f32
      %20 = vector.broadcast %cst_16 : f32 to vector<8x128xf32>
      %c0_17 = arith.constant 0 : index
      %c0_18 = arith.constant 0 : index
      %21 = vector.load %arg5[%c0_17, %c0_18] : memref<8x128xf32, #tpu.memory_space<vmem>>, vector<8x128xf32>
      tpu.vector_store %arg5[%c0_17, %c0_18], %20 {strides = array<i32>} : memref<8x128xf32, #tpu.memory_space<vmem>>, vector<8x128xf32>,
    } else {
    }
    %c0 = arith.constant 0 : index
    %c0_1 = arith.constant 0 : index
    %3 = vector.load %arg2[%c0, %c0_1] : memref<16x128xf32, #tpu.memory_space<vmem>>, vector<16x128xf32>
    %c0_2 = arith.constant 0 : index
    %c0_3 = arith.constant 0 : index
    %4 = vector.load %arg3[%c0_2, %c0_3] : memref<16x128xf32, #tpu.memory_space<vmem>>, vector<16x128xf32>
    %5 = arith.subf %4, %3 : vector<16x128xf32>
    %c0_4 = arith.constant 0 : index
    %c0_5 = arith.constant 0 : index
    %6 = vector.load %arg4[%c0_4, %c0_5] : memref<8x128xf32, #tpu.memory_space<vmem>>, vector<8x128xf32>
    %7 = arith.mulf %5, %5 : vector<16x128xf32>
    %8 = vector.shape_cast %7 : vector<16x128xf32> to vector<2x8x128xf32>
    %cst = arith.constant dense<0.000000e+00> : vector<8x128xf32>
    %9 = vector.multi_reduction <add>, %8, %cst [0] : vector<2x8x128xf32> to vector<8x128xf32>
    %10 = arith.addf %6, %9 : vector<8x128xf32>
    %c0_6 = arith.constant 0 : index
    %c0_7 = arith.constant 0 : index
    %11 = vector.load %arg4[%c0_6, %c0_7] : memref<8x128xf32, #tpu.memory_space<vmem>>, vector<8x128xf32>
    tpu.vector_store %arg4[%c0_6, %c0_7], %10 {strides = array<i32>} : memref<8x128xf32, #tpu.memory_space<vmem>>, vector<8x128xf32>,
    %c0_8 = arith.constant 0 : index
    %c0_9 = arith.constant 0 : index
    %12 = vector.load %arg5[%c0_8, %c0_9] : memref<8x128xf32, #tpu.memory_space<vmem>>, vector<8x128xf32>
    %13 = arith.mulf %4, %4 : vector<16x128xf32>
    %14 = vector.shape_cast %13 : vector<16x128xf32> to vector<2x8x128xf32>
    %cst_10 = arith.constant dense<0.000000e+00> : vector<8x128xf32>
    %15 = vector.multi_reduction <add>, %14, %cst_10 [0] : vector<2x8x128xf32> to vector<8x128xf32>
    %16 = arith.addf %12, %15 : vector<8x128xf32>
    %c0_11 = arith.constant 0 : index
    %c0_12 = arith.constant 0 : index
    %17 = vector.load %arg5[%c0_11, %c0_12] : memref<8x128xf32, #tpu.memory_space<vmem>>, vector<8x128xf32>
    tpu.vector_store %arg5[%c0_11, %c0_12], %16 {strides = array<i32>} : memref<8x128xf32, #tpu.memory_space<vmem>>, vector<8x128xf32>,
    return
  }
  func.func @transform_0(%arg0: i32, %arg1: i32) -> (i32, i32) {
    %c1_i32 = arith.constant 1 : i32
    %0 = arith.muli %arg0, %c1_i32 : i32
    %1 = arith.addi %0, %arg1 : i32
    %c0_i32 = arith.constant 0 : i32
    %2 = arith.minsi %1, %c0_i32 : i32
    %c0_i32_0 = arith.constant 0 : i32
    %c0_i32_1 = arith.constant 0 : i32
    return %2, %c0_i32_0 : i32, i32
  }
  func.func @transform_1(%arg0: i32, %arg1: i32) -> (i32, i32) {
    %c1_i32 = arith.constant 1 : i32
    %0 = arith.muli %arg0, %c1_i32 : i32
    %1 = arith.addi %0, %arg1 : i32
    %c0_i32 = arith.constant 0 : i32
    %2 = arith.minsi %1, %c0_i32 : i32
    %c0_i32_0 = arith.constant 0 : i32
    %c0_i32_1 = arith.constant 0 : i32
    return %2, %c0_i32_0 : i32, i32
  }
  func.func @transform_2(%arg0: i32, %arg1: i32) -> (i32, i32) {
    %c0_i32 = arith.constant 0 : i32
    %c0_i32_0 = arith.constant 0 : i32
    return %arg0, %c0_i32 : i32, i32
  }
  func.func @transform_3(%arg0: i32, %arg1: i32) -> (i32, i32) {
    %c0_i32 = arith.constant 0 : i32
    %c0_i32_0 = arith.constant 0 : i32
    return %arg0, %c0_i32 : i32, i32
  }
}

</mosaic_0001>

<llo_original>
// kernel: tpu_custom_call.1
$region0: #{tpu_custom_call.1}
  #allocation0 [shape = 'u32[]', space=smem, size = 0x4, offset = 0x4, fixed_abs, tag = 'smem constant byte address 0x4 - core index']
  #allocation1 [shape = 'u32[72,128]{1,0:T(1,128)}', space=vmem, size = 0x9000, scoped, tag = 'internal scratch']
  %s0 = inlined_call_operand.hbm [shape: f32[16,128], index: 0, kind: input, shape index: {}]
  %s1 = inlined_call_operand.hbm [shape: f32[16,128], index: 1, kind: input, shape index: {}]
  %s2 = inlined_call_operand.hbm [shape: f32[8,128], index: 2, kind: output, shape index: {0}]
  %s3 = inlined_call_operand.hbm [shape: f32[8,128], index: 3, kind: output, shape index: {1}]
  %4 = xla_tuple %s2, %s3
  %s5 = sld [smem:[#allocation0]]
  $region38: #{tpu_custom_call.1} parent=0
    _
  %s7 = ssub.s32 1, %s5
  %s8 = scalar_select 0, %s7, %s5
  $region1: #{tpu_custom_call.1} parent=0
    #allocation2 [shape = 'u8[8192]{0}', space=vmem, size = 0x2000, scoped, tag = 'input window, operand 0, single buffered']
    #allocation3 [shape = 's32[1]{0}', space=sflag, size = 0x4, scoped, tag = 'scoped memory for tpu_custom_call.1']
    #allocation4 [shape = 's32[1]{0}', space=sflag, size = 0x4, scoped, tag = 'scoped memory for tpu_custom_call.1']
    #allocation5 [shape = 'u8[8192]{0}', space=vmem, size = 0x2000, scoped, tag = 'input window, operand 1, single buffered']
    #allocation6 [shape = 's32[1]{0}', space=sflag, size = 0x4, scoped, tag = 'scoped memory for tpu_custom_call.1']
    #allocation7 [shape = 'u8[4096]{0}', space=vmem, size = 0x1000, scoped, tag = 'output window, operand 0, single buffered']
    #allocation8 [shape = 'u8[4096]{0}', space=vmem, size = 0x1000, scoped, tag = 'output window, operand 1, single buffered']
    #allocation9 [shape = 's32[1]{0}', space=sflag, size = 0x4, scoped, tag = 'scoped memory for tpu_custom_call.1']
    %9 = vsyncpa [#allocation3], 0
    %10 = vsyncpa [#allocation6], 0
    %11 = vsyncpa [#allocation4], 0
    %12 = vsyncpa [#allocation9], 0
    // Predicated region
    $region2: #{tpu_custom_call.1} parent=1 // pred_check
      _
    $region3: #{tpu_custom_call.1} parent=1 // pred_check_branch
      %14 = sbr.rel (0) target = $region5
    $region4: #{tpu_custom_call.1} parent=1 // pred_region
      %s15 = sadd.s32 0, 0
      %p16 = scmp.lt.s32.totalorder %s15, 0
      %s17 = scalar_select %p16, %s15, 0
      %s18 = smul.u32 2, %s17
      %20 = vsyncadd [#allocation3], 0
      %s21 = smul.addr %s18, 8
      %s22 = scalar_lea.hbm %s0, %s21
      %s23 = sshll.u32 %s22, 4
      %s24 = int_to_ptr.hbm [resolvable:$true] %s23
      %s25 = sshll.u32 [#allocation2], 4
      %s26 = int_to_ptr.vmem [resolvable:$true] %s25
      %31 = dma.hbm_to_vmem [thread:$0]  %s24, 256, %s26, [#allocation3], 128, 128, 8
    $region5: #{tpu_custom_call.1} parent=1 // pred_fallthru
      _
    // Predicated region
    $region6: #{tpu_custom_call.1} parent=1 // pred_check
      _
    $region7: #{tpu_custom_call.1} parent=1 // pred_check_branch
      %33 = sbr.rel (0) target = $region9
    $region8: #{tpu_custom_call.1} parent=1 // pred_region
      %s34 = sadd.s32 0, 0
      %p35 = scmp.lt.s32.totalorder %s34, 0
      %s36 = scalar_select %p35, %s34, 0
      %s37 = smul.u32 2, %s36
      %39 = vsyncadd [#allocation6], 0
      %s40 = smul.addr %s37, 8
      %s41 = scalar_lea.hbm %s1, %s40
      %s42 = sshll.u32 %s41, 4
      %s43 = int_to_ptr.hbm [resolvable:$true] %s42
      %s44 = sshll.u32 [#allocation5], 4
      %s45 = int_to_ptr.vmem [resolvable:$true] %s44
      %50 = dma.hbm_to_vmem [thread:$0]  %s43, 256, %s45, [#allocation6], 128, 128, 8
    $region9: #{tpu_custom_call.1} parent=1 // pred_fallthru
      _
    // Predicated region
    $region10: #{tpu_custom_call.1} parent=1 // pred_check
      _
    $region11: #{tpu_custom_call.1} parent=1 // pred_check_branch
      %52 = sbr.rel (0) target = $region13
    $region12: #{tpu_custom_call.1} parent=1 // pred_region
      %54 = dma.done [#allocation3], 256
    $region13: #{tpu_custom_call.1} parent=1 // pred_fallthru
      _
    // Predicated region
    $region14: #{tpu_custom_call.1} parent=1 // pred_check
      _
    $region15: #{tpu_custom_call.1} parent=1 // pred_check_branch
      %56 = sbr.rel (0) target = $region17
    $region16: #{tpu_custom_call.1} parent=1 // pred_region
      %58 = dma.done [#allocation6], 256
    $region17: #{tpu_custom_call.1} parent=1 // pred_fallthru
      _
    %s59 = sadd.s32 0, 0
    %p60 = scmp.lt.s32.totalorder %s59, 0
    %s61 = scalar_select %p60, %s59, 0
    %s62 = smul.u32 2, %s61
    %s63 = sadd.s32 0, 0
    %p64 = scmp.lt.s32.totalorder %s63, 0
    %s65 = scalar_select %p64, %s63, 0
    %s66 = smul.u32 2, %s65
    %p67 = scmp.eq.s32.totalorder 0, 0
    // Predicated region
    $region18: #{tpu_custom_call.1} parent=1 // pred_check
      %p68 = pneg %p67
    $region19: #{tpu_custom_call.1} parent=1 // pred_check_branch
      %70 = sbr.rel (%p68) target = $region21
    $region20: #{tpu_custom_call.1} parent=1 // pred_region
      %71 = vst [vmem:[#allocation7] sm:$0xff] 0.0
      %72 = vst [vmem:[#allocation8] sm:$0xff] 0.0
    $region21: #{tpu_custom_call.1} parent=1 // pred_fallthru
      _
    %v73 = vld [vmem:[#allocation2] sm:$0xff]
    %v74 = vld [vmem:[#allocation2 + $0x8] sm:$0xff]
    %v75 = vld [vmem:[#allocation5] sm:$0xff]
    %v76 = vld [vmem:[#allocation5 + $0x8] sm:$0xff]
    %v77 = vsub.f32 %v75, %v73
    %v78 = vsub.f32 %v76, %v74
    %v79 = vld [vmem:[#allocation7] sm:$0xff]
    %v80 = vmul.f32 %v77, %v77
    %v81 = vmul.f32 %v78, %v78
    %v82 = vadd.f32 %v80, %v81
    %v83 = vadd.f32 %v79, %v82
    %84 = vst [vmem:[#allocation7] sm:$0xff] %v83
    %v85 = vld [vmem:[#allocation8] sm:$0xff]
    %v86 = vmul.f32 %v75, %v75
    %v87 = vmul.f32 %v76, %v76
    %v88 = vadd.f32 %v86, %v87
    %v89 = vadd.f32 %v85, %v88
    %90 = vst [vmem:[#allocation8] sm:$0xff] %v89
    // Predicated region
    $region22: #{tpu_custom_call.1} parent=1 // pred_check
      _
    $region23: #{tpu_custom_call.1} parent=1 // pred_check_branch
      %92 = sbr.rel (0) target = $region25
    $region24: #{tpu_custom_call.1} parent=1 // pred_region
      %94 = vsyncadd [#allocation4], 0
      %s96 = sshll.u32 [#allocation7], 4
      %s97 = int_to_ptr.vmem [resolvable:$true] %s96
      %s98 = sshll.u32 %s2, 4
      %s99 = int_to_ptr.hbm [resolvable:$true] %s98
      %101 = dma.vmem_to_hbm [thread:$0]  %s97, 128, %s99, [#allocation4]
    $region25: #{tpu_custom_call.1} parent=1 // pred_fallthru
      _
    // Predicated region
    $region26: #{tpu_custom_call.1} parent=1 // pred_check
      _
    $region27: #{tpu_custom_call.1} parent=1 // pred_check_branch
      %103 = sbr.rel (0) target = $region29
    $region28: #{tpu_custom_call.1} parent=1 // pred_region
      %105 = vsyncadd [#allocation9], 0
      %s107 = sshll.u32 [#allocation8], 4
      %s108 = int_to_ptr.vmem [resolvable:$true] %s107
      %s109 = sshll.u32 %s3, 4
      %s110 = int_to_ptr.hbm [resolvable:$true] %s109
      %112 = dma.vmem_to_hbm [thread:$0]  %s108, 128, %s110, [#allocation9]
    $region29: #{tpu_custom_call.1} parent=1 // pred_fallthru
      _
    // Predicated region
    $region30: #{tpu_custom_call.1} parent=1 // pred_check
      _
    $region31: #{tpu_custom_call.1} parent=1 // pred_check_branch
      %114 = sbr.rel (0) target = $region33
    $region32: #{tpu_custom_call.1} parent=1 // pred_region
      %116 = dma.done [#allocation4], 128
    $region33: #{tpu_custom_call.1} parent=1 // pred_fallthru
      _
    // Predicated region
    $region34: #{tpu_custom_call.1} parent=1 // pred_check
      _
    $region35: #{tpu_custom_call.1} parent=1 // pred_check_branch
      %118 = sbr.rel (0) target = $region37
    $region36: #{tpu_custom_call.1} parent=1 // pred_region
      %120 = dma.done [#allocation9], 128
    $region37: #{tpu_custom_call.1} parent=1 // pred_fallthru
      _
    %121 = vsyncpa [#allocation3], 1
    %122 = vsyncpa [#allocation6], 1
    %123 = vsyncpa [#allocation4], 1
    %124 = vsyncpa [#allocation9], 1

</llo_original>
